<compile_context>
chip_gen: v6e
topology: v6e:2x2x1
jax: 0.10.0
libtpu: 0.0.40
codegen_flags: <defaults>
</compile_context>

<pallas_src>
import jax
import jax.numpy as jnp
from jax.experimental import pallas as pl
from jax.experimental.pallas import tpu as pltpu


def _attention_kernel(x_ref, h_ref, g_ref, ssq_ref):
    """B_blk batch elements per grid step.

    x_ref:   (B_blk, N, E) bf16  embeddings
    h_ref:   (B_blk, N, H) bf16  hidden states
    g_ref:   (B_blk, N, H) bf16  unnormalized attention output
    ssq_ref: (1, 1, 1)     f32   sum(g*g) over this block (global norm is finished outside)
    """
    # --- row L2 normalization (f32 math, EUP rsqrt instead of div + sqrt) ---
    # No epsilon, matching PyTorch exactly (an all-zero x row would NaN there too).
    xf = x_ref[...].astype(jnp.float32)                                # (Bb, N, E)
    inv_norm = jax.lax.rsqrt(jnp.sum(xf * xf, axis=2, keepdims=True))  # (Bb, N, 1)
    xn = (xf * inv_norm).astype(jnp.bfloat16)                          # bf16 MXU feed

    # --- cosine-similarity scores, f32 accumulation on the MXU ---
    # (dot_general with rhs contracting on its last dim; no separate XLU transpose of xn
    #  is materialized by Mosaic for this form.)
    s = jnp.einsum("bne,bme->bnm", xn, xn,
                   preferred_element_type=jnp.float32)                 # (Bb, N, N) f32

    # --- softmax with deferred normalization ---
    # scores are cosine similarities in [-1, 1]: exp cannot overflow -> skip max-subtraction.
    e = jnp.exp(s)                                                     # (Bb, N, N) f32
    row_sum = jnp.sum(e, axis=2, keepdims=True)                        # (Bb, N, 1) f32

    # unnormalized weighted sum of hidden states (bf16 operands, f32 accumulation)
    g_un = jnp.einsum("bnm,bmh->bnh", e.astype(jnp.bfloat16), h_ref[...],
                      preferred_element_type=jnp.float32)              # (Bb, N, H) f32

    # apply the softmax denominator once per output row (O(N*H) instead of O(N^2))
    g = g_un * pl.reciprocal(row_sum, approx=True)                     # (Bb, N, H) f32

    g_ref[...] = g.astype(g_ref.dtype)
    ssq_ref[...] = jnp.sum(g * g).reshape(1, 1, 1)


def _vmem_budget_bytes():
    """~85% of physical VMEM (generation-aware; safe on 64 MiB v7x and 128 MiB v5e/v6e)."""
    cap = 64 << 20  # conservative fallback = v7x physical VMEM
    try:
        info = pltpu.get_tpu_info()
        cap = int(getattr(info, "vmem_capacity_bytes", cap)) or cap
    except Exception:
        pass
    return int(0.85 * cap)


def _per_batch_step_bytes(N, E, H):
    """VMEM bytes per batch element inside one grid step (incl. pipelining + temporaries)."""
    bf16, f32 = 2, 4
    return (
        2 * bf16 * (N * E + N * H)   # double-buffered bf16 x / h input blocks
        + 2 * bf16 * N * H           # double-buffered bf16 g output block
        + f32 * N * E                # f32 upcast of x for the row norms
        + bf16 * N * E               # bf16 xn copy (MXU feed)
        + f32 * N * N                # f32 scores
        + f32 * N * N                # f32 exp(scores)
        + bf16 * N * N               # bf16 exp copy (MXU feed)
        + 2 * f32 * N * H            # f32 accumulator + scaled g
    )


def _choose_batch_block(B, N, E, H, budget):
    """Largest divisor of B that fits VMEM while keeping >=2 grid steps (v7x: 2 TCs)."""
    per_b = _per_batch_step_bytes(N, E, H)
    slack = 1 << 20
    best = 1
    for d in range(1, B + 1):
        if B % d != 0:
            continue
        if d * per_b + slack > budget:
            continue
        if B >= 2 and B // d < 2:
            continue  # keep at least 2 grid steps on the parallel axis
        best = max(best, d)
    return best


@jax.jit
def attention_forward(x, h):
    """x: (N, B, E), h: (N, B, H)  ->  y: (N, B, H) f32   (PyTorch axis convention)."""
    N, B, E = x.shape
    H = h.shape[-1]

    # Layout glue: tile over the batch axis (must be a leading block dim), and fold the bf16
    # downcast into the transpose so every HBM pass (transpose, kernel DMA) moves bf16.
    xb = jnp.transpose(x, (1, 0, 2)).astype(jnp.bfloat16)   # (B, N, E)
    hb = jnp.transpose(h, (1, 0, 2)).astype(jnp.bfloat16)   # (B, N, H)

    budget = _vmem_budget_bytes()
    bblk = _choose_batch_block(B, N, E, H, budget)
    nb = B // bblk

    est_bytes = bblk * _per_batch_step_bytes(N, E, H) + (1 << 20)
    vmem_limit = int(min(max(2 * est_bytes, 32 << 20), budget))

    g, ssq = pl.pallas_call(
        _attention_kernel,
        out_shape=(
            jax.ShapeDtypeStruct((B, N, H), jnp.bfloat16),
            jax.ShapeDtypeStruct((nb, 1, 1), jnp.float32),
        ),
        grid=(nb,),
        in_specs=[
            pl.BlockSpec((bblk, N, E), lambda b: (b, 0, 0)),
            pl.BlockSpec((bblk, N, H), lambda b: (b, 0, 0)),
        ],
        out_specs=(
            pl.BlockSpec((bblk, N, H), lambda b: (b, 0, 0)),
            pl.BlockSpec((1, 1, 1), lambda b: (b, 0, 0)),
        ),
        compiler_params=pltpu.CompilerParams(
            dimension_semantics=("parallel",),
            vmem_limit_bytes=vmem_limit,
        ),
    )(xb, hb)

    # Global Frobenius normalization: one scalar rsqrt + multiply, fused by XLA with the
    # transpose back to the (N, B, H) convention.
    scale = jax.lax.rsqrt(jnp.sum(ssq))
    return (jnp.transpose(g, (1, 0, 2)).astype(jnp.float32)) * scale


def _reference_forward(x, h):
    """Pure-JAX f32 reference mirroring the PyTorch module, for a correctness check."""
    xb = jnp.transpose(x, (1, 0, 2)).astype(jnp.float32)   # (B, N, E)
    hb = jnp.transpose(h, (1, 0, 2)).astype(jnp.float32)   # (B, N, H)
    xn = xb / jnp.linalg.norm(xb, axis=2, keepdims=True)
    s = jnp.einsum("bne,bme->bnm", xn, xn)
    p = jax.nn.softmax(s, axis=2)
    g = jnp.einsum("bnm,bmh->bnh", p, hb)                  # the *H factor cancels in the norm
    g = jnp.transpose(g, (1, 0, 2))                        # (N, B, H)
    return g / jnp.linalg.norm(g)


if __name__ == "__main__":
    # small shapes consistent with the forward: N=seq, B=batch, E=embed, H=hidden
    # (E, H chosen as lane-dense multiples of 128 so MXU feeds / output stores are unmasked).
    N, B, E, H = 8, 4, 128, 128
    key = jax.random.PRNGKey(0)
    kx, kh = jax.random.split(key)
    x = jax.random.normal(kx, (N, B, E), dtype=jnp.float32)
    h = jax.random.normal(kh, (N, B, H), dtype=jnp.float32)

    y = jax.block_until_ready(attention_forward(x, h))
    assert y.shape == (N, B, H)

    y_ref = _reference_forward(x, h)
    # bf16 inputs/outputs + bf16 MXU operands (f32 accumulation) + approx EUP reciprocal
    # -> ~1% numeric drift.
    rel_err = jnp.linalg.norm(y - y_ref) / jnp.linalg.norm(y_ref)
    assert bool(rel_err < 5e-2), f"Pallas kernel mismatch vs reference (rel_err={rel_err})"

    print("KERNEL_OK")
</pallas_src>

<mosaic_0001>
module attributes {stable_mosaic.version = 11 : i64} {
  func.func @_attention_kernel(%arg0: i32, %arg1: memref<2x8x128xbf16, #tpu.memory_space<vmem>>, %arg2: memref<2x8x128xbf16, #tpu.memory_space<vmem>>, %arg3: memref<2x8x128xbf16, #tpu.memory_space<vmem>>, %arg4: memref<1x1x1xf32, #tpu.memory_space<vmem>>) attributes {dimension_semantics = [#tpu.dimension_semantics<parallel>], iteration_bounds = array<i64: 2>, scalar_prefetch = 0 : i64, scratch_operands = 0 : i64, tpu.core_type = #tpu.core_type<tc>, window_params = [{transform_indices = @transform_0, window_bounds = array<i64: 2, 8, 128>}, {transform_indices = @transform_1, window_bounds = array<i64: 2, 8, 128>}, {transform_indices = @transform_2, window_bounds = array<i64: 2, 8, 128>}, {transform_indices = @transform_3, window_bounds = array<i64: 1, 1, 1>}]} {
    %c0 = arith.constant 0 : index
    %c0_0 = arith.constant 0 : index
    %c0_1 = arith.constant 0 : index
    %0 = vector.load %arg1[%c0, %c0_0, %c0_1] : memref<2x8x128xbf16, #tpu.memory_space<vmem>>, vector<2x8x128xbf16>
    %1 = arith.extf %0 : vector<2x8x128xbf16> to vector<2x8x128xf32>
    %2 = arith.mulf %1, %1 : vector<2x8x128xf32>
    %cst = arith.constant dense<0.000000e+00> : vector<2x8xf32>
    %3 = vector.multi_reduction <add>, %2, %cst [2] : vector<2x8x128xf32> to vector<2x8xf32>
    %4 = vector.shape_cast %3 : vector<2x8xf32> to vector<2x8x1xf32>
    %5 = math.rsqrt %4 : vector<2x8x1xf32>
    %6 = vector.broadcast %5 : vector<2x8x1xf32> to vector<2x8x128xf32>
    %7 = arith.mulf %1, %6 : vector<2x8x128xf32>
    %8 = arith.truncf %7 : vector<2x8x128xf32> to vector<2x8x128xbf16>
    "tpu.trace_start"() <{level = 10 : i32, message = "bne,bme->bnm"}> : () -> ()
    %cst_2 = arith.constant dense<0.000000e+00> : vector<2x8x8xf32>
    %9 = tpu.matmul %8, %8, %cst_2 {dimension_numbers = #tpu.dot_dimension_numbers<[2], [2], [1], [1], [0, 0, 0, 1, 1, 1], [0], [0]>} : vector<2x8x128xbf16>, vector<2x8x128xbf16>, vector<2x8x8xf32> -> vector<2x8x8xf32>
    "tpu.trace_stop"() : () -> ()
    %10 = math.exp %9 : vector<2x8x8xf32>
    %cst_3 = arith.constant dense<0.000000e+00> : vector<2x8xf32>
    %11 = vector.multi_reduction <add>, %10, %cst_3 [2] : vector<2x8x8xf32> to vector<2x8xf32>
    %12 = vector.shape_cast %11 : vector<2x8xf32> to vector<2x8x1xf32>
    %13 = arith.truncf %10 : vector<2x8x8xf32> to vector<2x8x8xbf16>
    %c0_4 = arith.constant 0 : index
    %c0_5 = arith.constant 0 : index
    %c0_6 = arith.constant 0 : index
    %14 = vector.load %arg2[%c0_4, %c0_5, %c0_6] : memref<2x8x128xbf16, #tpu.memory_space<vmem>>, vector<2x8x128xbf16>
    "tpu.trace_start"() <{level = 10 : i32, message = "bnm,bmh->bnh"}> : () -> ()
    %cst_7 = arith.constant dense<0.000000e+00> : vector<2x8x128xf32>
    %15 = tpu.matmul %13, %14, %cst_7 {dimension_numbers = #tpu.dot_dimension_numbers<[2], [1], [1], [2], [0, 0, 0, 1, 1, 2], [0], [0]>} : vector<2x8x8xbf16>, vector<2x8x128xbf16>, vector<2x8x128xf32> -> vector<2x8x128xf32>
    "tpu.trace_stop"() : () -> ()
    %16 = tpu.reciprocal %12 {approx = true} : vector<2x8x1xf32> -> vector<2x8x1xf32>
    %17 = vector.broadcast %16 : vector<2x8x1xf32> to vector<2x8x128xf32>
    %18 = arith.mulf %15, %17 : vector<2x8x128xf32>
    %19 = arith.truncf %18 : vector<2x8x128xf32> to vector<2x8x128xbf16>
    %c0_8 = arith.constant 0 : index
    %c0_9 = arith.constant 0 : index
    %c0_10 = arith.constant 0 : index
    %20 = vector.load %arg3[%c0_8, %c0_9, %c0_10] : memref<2x8x128xbf16, #tpu.memory_space<vmem>>, vector<2x8x128xbf16>
    tpu.vector_store %arg3[%c0_8, %c0_9, %c0_10], %19 {strides = array<i32>} : memref<2x8x128xbf16, #tpu.memory_space<vmem>>, vector<2x8x128xbf16>,
    %21 = arith.mulf %18, %18 : vector<2x8x128xf32>
    %22 = vector.shape_cast %21 : vector<2x8x128xf32> to vector<1x2x8x128xf32>
    %cst_11 = arith.constant dense<0.000000e+00> : vector<1xf32>
    %23 = vector.multi_reduction <add>, %22, %cst_11 [1, 2, 3] : vector<1x2x8x128xf32> to vector<1xf32>
    %24 = vector.shape_cast %23 : vector<1xf32> to vector<1x1x1x1xf32>
    %25 = vector.extract %24[0, 0, 0, 0] : f32 from vector<1x1x1x1xf32>
    %26 = vector.broadcast %25 : f32 to vector<1x1x1xf32>
    %c0_12 = arith.constant 0 : index
    %c0_13 = arith.constant 0 : index
    %c0_14 = arith.constant 0 : index
    %27 = vector.load %arg4[%c0_12, %c0_13, %c0_14] : memref<1x1x1xf32, #tpu.memory_space<vmem>>, vector<1x1x1xf32>
    tpu.vector_store %arg4[%c0_12, %c0_13, %c0_14], %26 {strides = array<i32>} : memref<1x1x1xf32, #tpu.memory_space<vmem>>, vector<1x1x1xf32>,
    return
  }
  func.func @transform_0(%arg0: i32) -> (i32, i32, i32) {
    %c0_i32 = arith.constant 0 : i32
    %c0_i32_0 = arith.constant 0 : i32
    %c0_i32_1 = arith.constant 0 : i32
    return %arg0, %c0_i32, %c0_i32_0 : i32, i32, i32
  }
  func.func @transform_1(%arg0: i32) -> (i32, i32, i32) {
    %c0_i32 = arith.constant 0 : i32
    %c0_i32_0 = arith.constant 0 : i32
    %c0_i32_1 = arith.constant 0 : i32
    return %arg0, %c0_i32, %c0_i32_0 : i32, i32, i32
  }
  func.func @transform_2(%arg0: i32) -> (i32, i32, i32) {
    %c0_i32 = arith.constant 0 : i32
    %c0_i32_0 = arith.constant 0 : i32
    %c0_i32_1 = arith.constant 0 : i32
    return %arg0, %c0_i32, %c0_i32_0 : i32, i32, i32
  }
  func.func @transform_3(%arg0: i32) -> (i32, i32, i32) {
    %c0_i32 = arith.constant 0 : i32
    %c0_i32_0 = arith.constant 0 : i32
    %c0_i32_1 = arith.constant 0 : i32
    return %arg0, %c0_i32, %c0_i32_0 : i32, i32, i32
  }
}

</mosaic_0001>

<llo_original>
// kernel: attention_forward.1
$region0: #{attention_forward.1}
  #allocation0 [shape = 'u32[]', space=smem, size = 0x4, offset = 0x4, fixed_abs, tag = 'smem constant byte address 0x4 - core index']
  #allocation1 [shape = 'u32[144,128]{1,0:T(1,128)}', space=vmem, size = 0x12000, scoped, tag = 'internal scratch']
  %s0 = inlined_call_operand.vmem [shape: bf16[4,8,128], index: 0, kind: input, shape index: {}]
  %s1 = inlined_call_operand.vmem [shape: bf16[4,8,128], index: 1, kind: input, shape index: {}]
  %s2 = inlined_call_operand.vmem [shape: bf16[4,8,128], index: 2, kind: output, shape index: {0}]
  %s3 = inlined_call_operand.vmem [shape: f32[2,1,1], index: 3, kind: output, shape index: {1}]
  %4 = xla_tuple %s2, %s3
  %s5 = sld [smem:[#allocation0]]
  $region49: #{attention_forward.1} parent=0
    _
  %s7 = ssub.s32 1, %s5
  %s8 = scalar_select 0, %s7, %s5
  loop: start=0, step=1, limit=4
  $region2: #{attention_forward.1} parent=0 // loop_pre_header
    _
  $region3: #{attention_forward.1} parent=0 // loop_header
    %s10 = sphi 0, %s14
    %p11 = scmp.ge.s32.totalorder %s10, 4
    %s20 = sphi 0, %s22
    %s23 = sphi 0, %s20
    %s24 = sphi 0, %s23
    %s40 = sphi 0, %s24
    %s46 = sphi 0, %s48
    %s49 = sphi 0, %s46
    %s50 = sphi 0, %s49
    %s66 = sphi 0, %s50
    %s72 = sphi 0, %s74
    %s75 = sphi 0, %s72
    %s76 = sphi 0, %s75
    %s92 = sphi 0, %s76
    %s98 = sphi 0, %s100
    %s101 = sphi 0, %s98
    %s102 = sphi 0, %s101
    %s118 = sphi 0, %s102
  $region4: #{attention_forward.1} parent=0 // loop_header_branch
    %13 = sbr.rel (%p11) target = $region8
  $region5: #{attention_forward.1} parent=0 // loop_body
    %s15 = ssub.s32 %s10, 1
    %s16 = ssub.s32 %s10, 2
    %s17 = sadd.s32 %s10, 1
    %s18 = ssub.s32 %s10, %s17
    %p19 = scmp.eq.s32.totalorder %s18, 0
    %s21 = sadd.s32 %s20, 1
    %s22 = scalar_select %p19, %s20, %s21
    %p25 = pneg %p19
    %p26 = scmp.eq.s32.totalorder %s10, 1
    %p27 = por %p25, %p26
    %p28 = scmp.ne.s32.totalorder %s20, %s23
    %p29 = scmp.eq.s32.totalorder %s10, 0
    %p30 = por %p28, %p29
    %p31 = scmp.ne.s32.totalorder %s20, %s23
    %p32 = scmp.eq.s32.totalorder %s15, 1
    %p33 = por %p31, %p32
    %p34 = scmp.ne.s32.totalorder %s23, %s24
    %p35 = scmp.eq.s32.totalorder %s15, 0
    %p36 = por %p34, %p35
    %p37 = scmp.ne.s32.totalorder %s23, %s24
    %p38 = scmp.eq.s32.totalorder %s16, 1
    %p39 = por %p37, %p38
    %p41 = scmp.ne.s32.totalorder %s24, %s40
    %p42 = scmp.eq.s32.totalorder %s16, 0
    %p43 = por %p41, %p42
    %s44 = ssub.s32 %s10, %s17
    %p45 = scmp.eq.s32.totalorder %s44, 0
    %s47 = sadd.s32 %s46, 1
    %s48 = scalar_select %p45, %s46, %s47
    %p51 = pneg %p45
    %p52 = scmp.eq.s32.totalorder %s10, 1
    %p53 = por %p51, %p52
    %p54 = scmp.ne.s32.totalorder %s46, %s49
    %p55 = scmp.eq.s32.totalorder %s10, 0
    %p56 = por %p54, %p55
    %p57 = scmp.ne.s32.totalorder %s46, %s49
    %p58 = scmp.eq.s32.totalorder %s15, 1
    %p59 = por %p57, %p58
    %p60 = scmp.ne.s32.totalorder %s49, %s50
    %p61 = scmp.eq.s32.totalorder %s15, 0
    %p62 = por %p60, %p61
    %p63 = scmp.ne.s32.totalorder %s49, %s50
    %p64 = scmp.eq.s32.totalorder %s16, 1
    %p65 = por %p63, %p64
    %p67 = scmp.ne.s32.totalorder %s50, %s66
    %p68 = scmp.eq.s32.totalorder %s16, 0
    %p69 = por %p67, %p68
    %s70 = ssub.s32 %s10, %s17
    %p71 = scmp.eq.s32.totalorder %s70, 0
    %s73 = sadd.s32 %s72, 1
    %s74 = scalar_select %p71, %s72, %s73
    %p77 = pneg %p71
    %p78 = scmp.eq.s32.totalorder %s10, 1
    %p79 = por %p77, %p78
    %p80 = scmp.ne.s32.totalorder %s72, %s75
    %p81 = scmp.eq.s32.totalorder %s10, 0
    %p82 = por %p80, %p81
    %p83 = scmp.ne.s32.totalorder %s72, %s75
    %p84 = scmp.eq.s32.totalorder %s15, 1
    %p85 = por %p83, %p84
    %p86 = scmp.ne.s32.totalorder %s75, %s76
    %p87 = scmp.eq.s32.totalorder %s15, 0
    %p88 = por %p86, %p87
    %p89 = scmp.ne.s32.totalorder %s75, %s76
    %p90 = scmp.eq.s32.totalorder %s16, 1
    %p91 = por %p89, %p90
    %p93 = scmp.ne.s32.totalorder %s76, %s92
    %p94 = scmp.eq.s32.totalorder %s16, 0
    %p95 = por %p93, %p94
    %s96 = ssub.s32 %s10, %s17
    %p97 = scmp.eq.s32.totalorder %s96, 0
    %s99 = sadd.s32 %s98, 1
    %s100 = scalar_select %p97, %s98, %s99
    %p103 = pneg %p97
    %p104 = scmp.eq.s32.totalorder %s10, 1
    %p105 = por %p103, %p104
    %p106 = scmp.ne.s32.totalorder %s98, %s101
    %p107 = scmp.eq.s32.totalorder %s10, 0
    %p108 = por %p106, %p107
    %p109 = scmp.ne.s32.totalorder %s98, %s101
    %p110 = scmp.eq.s32.totalorder %s15, 1
    %p111 = por %p109, %p110
    %p112 = scmp.ne.s32.totalorder %s101, %s102
    %p113 = scmp.eq.s32.totalorder %s15, 0
    %p114 = por %p112, %p113
    %p115 = scmp.ne.s32.totalorder %s101, %s102
    %p116 = scmp.eq.s32.totalorder %s16, 1
    %p117 = por %p115, %p116
    %p119 = scmp.ne.s32.totalorder %s102, %s118
    %p120 = scmp.eq.s32.totalorder %s16, 0
    %p121 = por %p119, %p120
    %p122 = scmp.le.s32.totalorder 1, %s10
    %p123 = scmp.lt.s32.totalorder %s10, 3
    %p124 = pnand %p122, %p123
    %p125 = pneg %p124
    // Predicated region
    $region9: #{attention_forward.1} parent=5 // pred_check
      _
    $region10: #{attention_forward.1} parent=5 // pred_check_branch
      %127 = sbr.rel (%p124) target = $region12
    $region11: #{attention_forward.1} parent=5 // pred_region
      %s128 = ssub.s32 %s10, 1
    $region12: #{attention_forward.1} parent=5 // pred_fallthru
      _
    %p129 = scmp.lt.s32.totalorder %s10, 2
    // Predicated region
    $region13: #{attention_forward.1} parent=5 // pred_check
      %p130 = pneg %p129
    $region14: #{attention_forward.1} parent=5 // pred_check_branch
      %132 = sbr.rel (%p130) target = $region16
    $region15: #{attention_forward.1} parent=5 // pred_region
      // Predicated region
      $region17: #{attention_forward.1} parent=15 // pred_check
        %p133 = pneg %p30
      $region18: #{attention_forward.1} parent=15 // pred_check_branch
        %135 = sbr.rel (%p133) target = $region20
      $region19: #{attention_forward.1} parent=15 // pred_region
        %s136 = smul.u32 2, %s10
        %p137 = scmp.lt.s32.totalorder %s136, 3
        %s138 = scalar_select %p137, %s136, 3
        %s139 = smul.addr %s138, 4
        %s140 = scalar_lea.vmem %s0, %s139
        %s141 = smul.u32 2, %s10
      $region20: #{attention_forward.1} parent=15 // pred_fallthru
        _
      // Predicated region
      $region21: #{attention_forward.1} parent=15 // pred_check
        %p142 = pneg %p56
      $region22: #{attention_forward.1} parent=15 // pred_check_branch
        %144 = sbr.rel (%p142) target = $region24
      $region23: #{attention_forward.1} parent=15 // pred_region
        %s145 = smul.u32 2, %s10
        %p146 = scmp.lt.s32.totalorder %s145, 3
        %s147 = scalar_select %p146, %s145, 3
        %s148 = smul.addr %s147, 4
        %s149 = scalar_lea.vmem %s1, %s148
        %s150 = smul.u32 2, %s10
      $region24: #{attention_forward.1} parent=15 // pred_fallthru
        _
    $region16: #{attention_forward.1} parent=5 // pred_fallthru
      _
    %p151 = scmp.le.s32.totalorder 1, %s10
    %p152 = scmp.lt.s32.totalorder %s10, 3
    %p153 = pnand %p151, %p152
    %p154 = pneg %p153
    // Predicated region
    $region25: #{attention_forward.1} parent=5 // pred_check
      _
    $region26: #{attention_forward.1} parent=5 // pred_check_branch
      %156 = sbr.rel (%p153) target = $region28
    $region27: #{attention_forward.1} parent=5 // pred_region
      %s157 = ssub.s32 %s10, 1
      %s158 = smul.u32 2, %s15
      %p159 = scmp.lt.s32.totalorder %s158, 3
      %s160 = scalar_select %p159, %s158, 3
      %s161 = smul.addr %s160, 4
      %s162 = scalar_lea.vmem %s0, %s161
      %p163 = pneg %p36
      %p164 = pneg %p33
      %s165 = smul.u32 2, %s15
      %p166 = scmp.lt.s32.totalorder %s165, 3
      %s167 = scalar_select %p166, %s165, 3
      %s168 = smul.addr %s167, 4
      %s169 = scalar_lea.vmem %s1, %s168
      %p170 = pneg %p62
      %p171 = pneg %p59
      %p172 = pneg %p88
      %p173 = pneg %p85
      %s174 = smul.u32 2, %s15
      %p175 = scmp.lt.s32.totalorder %s174, 3
      %s176 = scalar_select %p175, %s174, 3
      %s177 = smul.addr %s176, 4
      %s178 = scalar_lea.vmem %s2, %s177
      %p179 = pneg %p114
      %p180 = pneg %p111
      %p181 = scmp.lt.s32.totalorder %s15, 1
      %s182 = scalar_select %p181, %s15, 1
      %s183 = scalar_lea.vmem %s3, %s182
      %s184 = smul.u32 2, %s15
      %p185 = scmp.lt.s32.totalorder %s184, 3
      %s186 = scalar_select %p185, %s184, 3
      %s187 = smul.addr %s186, 4
      %s188 = scalar_lea.vmem %s0, %s187
      %s189 = smul.u32 2, %s15
      %s190 = smul.u32 2, %s15
      %p191 = scmp.lt.s32.totalorder %s190, 3
      %s192 = scalar_select %p191, %s190, 3
      %s193 = smul.addr %s192, 4
      %s194 = scalar_lea.vmem %s1, %s193
      %s195 = smul.u32 2, %s15
      %s196 = smul.u32 2, %s15
      %p197 = scmp.lt.s32.totalorder %s196, 3
      %s198 = scalar_select %p197, %s196, 3
      %s199 = smul.addr %s198, 4
      %s200 = scalar_lea.vmem %s2, %s199
      %s201 = smul.u32 2, %s15
      %p202 = scmp.lt.s32.totalorder %s15, 1
      %s203 = scalar_select %p202, %s15, 1
      %s204 = scalar_lea.vmem %s3, %s203
      %v206 = vld [vmem:[%s188] sm:$0xf]
      %v207 = vld [vmem:[%s188 + $0x4] sm:$0xf]
      %v208 = vunpack.c.l.bf16 %v206
      %v209 = vunpack.c.l.bf16 %v207
      %v210 = vmul.f32 %v208, %v208
      %v211 = vmul.f32 %v209, %v209
      %212 = vadd.xlane.f32.xlu0 %v210
      %v213 = vpop.xlane.xlu0 %212
      %214 = vadd.xlane.f32.xlu0 %v211
      %v215 = vpop.xlane.xlu0 %214
      %v216 = vrsqrt.pop %v213
      %v217 = vrsqrt.pop %v215
      %v218 = vmul.f32 %v208, %v216
      %v219 = vmul.f32 %v209, %v217
      %v220 = vpack.c.bf16 %v218, %v218
      %v221 = vpack.c.bf16 %v219, %v219
      %222 = vmatprep.subr.bf16.mxu0 0
      %223 = vmatpush1.bf16.xpose.msra.mxu0 0
      %224 = vmatprep.subr.bf16.mxu0 0
      %225 = vmatpush1.bf16.xpose.msra.mxu0 0
      %226 = vmatprep.subr.bf16.mxu0 0
      %227 = vmatpush1.bf16.xpose.msra.mxu0 0
      %228 = vmatprep.subr.bf16.mxu0 0
      %229 = vmatpush1.bf16.xpose.msra.mxu0 0
      %230 = vmatprep.subr.bf16.mxu0 0
      %231 = vmatpush1.bf16.xpose.msra.mxu0 0
      %232 = vmatprep.subr.bf16.mxu0 0
      %233 = vmatpush1.bf16.xpose.msra.mxu0 0
      %234 = vmatprep.subr.bf16.mxu0 0
      %235 = vmatpush1.bf16.xpose.msra.mxu0 0
      %236 = vmatprep.subr.bf16.mxu0 0
      %237 = vmatpush1.bf16.xpose.msra.mxu0 %v220
      %238 = vmatprep.subr.bf16.mxu0 0
      %239 = vmatpush2.bf16.xpose.msra.mxu0 0
      %240 = vmatprep.subr.bf16.mxu0 0
      %241 = vmatpush2.bf16.xpose.msra.mxu0 0
      %242 = vmatprep.subr.bf16.mxu0 0
      %243 = vmatpush2.bf16.xpose.msra.mxu0 0
      %244 = vmatprep.subr.bf16.mxu0 0
      %245 = vmatpush2.bf16.xpose.msra.mxu0 0
      %246 = vmatprep.subr.bf16.mxu0 0
      %247 = vmatpush2.bf16.xpose.msra.mxu0 0
      %248 = vmatprep.subr.bf16.mxu0 0
      %249 = vmatpush2.bf16.xpose.msra.mxu0 0
      %250 = vmatprep.subr.bf16.mxu0 0
      %251 = vmatpush2.bf16.xpose.msra.mxu0 0
      %252 = vmatprep.subr.bf16.mxu0 0
      %253 = vmatpush2.bf16.xpose.msra.mxu0 0
      %254 = vmatprep.mubr.bf16.mxu0 0
      %255 = vmatmul.mubr.bf16.gmra.mxu0 %v220
      %v256 = vpop.f32.mrf.mxu0
      %v257 = vadd.f32 0.0, %v256
      %v258 = vpop.f32.mrf.mxu0
      %v259 = vpop.f32.mrf.mxu0
      %v260 = vpop.f32.mrf.mxu0
      %261 = vdwg.mxu0
      %262 = vmatprep.subr.bf16.mxu0 0
      %263 = vmatpush1.bf16.xpose.msra.mxu0 0
      %264 = vmatprep.subr.bf16.mxu0 0
      %265 = vmatpush1.bf16.xpose.msra.mxu0 0
      %266 = vmatprep.subr.bf16.mxu0 0
      %267 = vmatpush1.bf16.xpose.msra.mxu0 0
      %268 = vmatprep.subr.bf16.mxu0 0
      %269 = vmatpush1.bf16.xpose.msra.mxu0 0
      %270 = vmatprep.subr.bf16.mxu0 0
      %271 = vmatpush1.bf16.xpose.msra.mxu0 0
      %272 = vmatprep.subr.bf16.mxu0 0
      %273 = vmatpush1.bf16.xpose.msra.mxu0 0
      %274 = vmatprep.subr.bf16.mxu0 0
      %275 = vmatpush1.bf16.xpose.msra.mxu0 0
      %276 = vmatprep.subr.bf16.mxu0 0
      %277 = vmatpush1.bf16.xpose.msra.mxu0 %v221
      %278 = vmatprep.subr.bf16.mxu0 0
      %279 = vmatpush2.bf16.xpose.msra.mxu0 0
      %280 = vmatprep.subr.bf16.mxu0 0
      %281 = vmatpush2.bf16.xpose.msra.mxu0 0
      %282 = vmatprep.subr.bf16.mxu0 0
      %283 = vmatpush2.bf16.xpose.msra.mxu0 0
      %284 = vmatprep.subr.bf16.mxu0 0
      %285 = vmatpush2.bf16.xpose.msra.mxu0 0
      %286 = vmatprep.subr.bf16.mxu0 0
      %287 = vmatpush2.bf16.xpose.msra.mxu0 0
      %288 = vmatprep.subr.bf16.mxu0 0
      %289 = vmatpush2.bf16.xpose.msra.mxu0 0
      %290 = vmatprep.subr.bf16.mxu0 0
      %291 = vmatpush2.bf16.xpose.msra.mxu0 0
      %292 = vmatprep.subr.bf16.mxu0 0
      %293 = vmatpush2.bf16.xpose.msra.mxu0 0
      %294 = vmatprep.mubr.bf16.mxu0 0
      %295 = vmatmul.mubr.bf16.gmra.mxu0 %v221
      %v296 = vpop.f32.mrf.mxu0
      %v297 = vadd.f32 0.0, %v296
      %v298 = vpop.f32.mrf.mxu0
      %v299 = vpop.f32.mrf.mxu0
      %v300 = vpop.f32.mrf.mxu0
      %301 = vdwg.mxu0
      %v302 = vmul.f32 %v257, 1.442695
      %v303 = vpow.pop %v302
      %v304 = vmul.f32 %v297, 1.442695
      %v305 = vpow.pop %v304
      %vm306 = vcmask 64512
      %v307 = vsel %vm306, %v303, 0.0
      %308 = vadd.xlane.f32.xlu0 %v307
      %v309 = vpop.xlane.xlu0 %308
      %v310 = vsel %vm306, %v305, 0.0
      %311 = vadd.xlane.f32.xlu0 %v310
      %v312 = vpop.xlane.xlu0 %311
      %v313 = vpack.c.bf16 %v303, %v303
      %v314 = vpack.c.bf16 %v305, %v305
      %v315 = vld [vmem:[%s194] sm:$0xf]
      %v316 = vld [vmem:[%s194 + $0x4] sm:$0xf]
      %v318 = vsel %vm306, %v313, 0
      %vm320 = vcmask 1043456
      %v322 = vsel %vm320, %v315, 0
      %324 = vmatprep.subr.bf16.mxu0 0
      %325 = vmatpush1.bf16.msra.mxu0 0
      %326 = vmatprep.subr.bf16.mxu0 0
      %327 = vmatpush1.bf16.msra.mxu0 0
      %328 = vmatprep.subr.bf16.mxu0 0
      %329 = vmatpush1.bf16.msra.mxu0 0
      %330 = vmatprep.subr.bf16.mxu0 0
      %331 = vmatpush1.bf16.msra.mxu0 0
      %332 = vmatprep.subr.bf16.mxu0 0
      %333 = vmatpush1.bf16.msra.mxu0 0
      %334 = vmatprep.subr.bf16.mxu0 0
      %335 = vmatpush1.bf16.msra.mxu0 0
      %336 = vmatprep.subr.bf16.mxu0 0
      %337 = vmatpush1.bf16.msra.mxu0 0
      %338 = vmatprep.subr.bf16.mxu0 0
      %339 = vmatpush1.bf16.msra.mxu0 %v322
      %340 = vmatprep.subr.bf16.mxu0 0
      %341 = vmatpush2.bf16.msra.mxu0 0
      %342 = vmatprep.subr.bf16.mxu0 0
      %343 = vmatpush2.bf16.msra.mxu0 0
      %344 = vmatprep.subr.bf16.mxu0 0
      %345 = vmatpush2.bf16.msra.mxu0 0
      %346 = vmatprep.subr.bf16.mxu0 0
      %347 = vmatpush2.bf16.msra.mxu0 0
      %348 = vmatprep.subr.bf16.mxu0 0
      %349 = vmatpush2.bf16.msra.mxu0 0
      %350 = vmatprep.subr.bf16.mxu0 0
      %351 = vmatpush2.bf16.msra.mxu0 0
      %352 = vmatprep.subr.bf16.mxu0 0
      %353 = vmatpush2.bf16.msra.mxu0 0
      %354 = vmatprep.subr.bf16.mxu0 0
      %355 = vmatpush2.bf16.msra.mxu0 0
      %356 = vmatprep.mubr.bf16.mxu0 0
      %357 = vmatmul.mubr.bf16.gmra.mxu0 %v318
      %v358 = vpop.f32.mrf.mxu0
      %v359 = vadd.f32 0.0, %v358
      %v360 = vpop.f32.mrf.mxu0
      %v361 = vpop.f32.mrf.mxu0
      %v362 = vpop.f32.mrf.mxu0
      %363 = vdwg.mxu0
      %v365 = vsel %vm306, %v314, 0
      %v368 = vsel %vm320, %v316, 0
      %370 = vmatprep.subr.bf16.mxu0 0
      %371 = vmatpush1.bf16.msra.mxu0 0
      %372 = vmatprep.subr.bf16.mxu0 0
      %373 = vmatpush1.bf16.msra.mxu0 0
      %374 = vmatprep.subr.bf16.mxu0 0
      %375 = vmatpush1.bf16.msra.mxu0 0
      %376 = vmatprep.subr.bf16.mxu0 0
      %377 = vmatpush1.bf16.msra.mxu0 0
      %378 = vmatprep.subr.bf16.mxu0 0
      %379 = vmatpush1.bf16.msra.mxu0 0
      %380 = vmatprep.subr.bf16.mxu0 0
      %381 = vmatpush1.bf16.msra.mxu0 0
      %382 = vmatprep.subr.bf16.mxu0 0
      %383 = vmatpush1.bf16.msra.mxu0 0
      %384 = vmatprep.subr.bf16.mxu0 0
      %385 = vmatpush1.bf16.msra.mxu0 %v368
      %386 = vmatprep.subr.bf16.mxu0 0
      %387 = vmatpush2.bf16.msra.mxu0 0
      %388 = vmatprep.subr.bf16.mxu0 0
      %389 = vmatpush2.bf16.msra.mxu0 0
      %390 = vmatprep.subr.bf16.mxu0 0
      %391 = vmatpush2.bf16.msra.mxu0 0
      %392 = vmatprep.subr.bf16.mxu0 0
      %393 = vmatpush2.bf16.msra.mxu0 0
      %394 = vmatprep.subr.bf16.mxu0 0
      %395 = vmatpush2.bf16.msra.mxu0 0
      %396 = vmatprep.subr.bf16.mxu0 0
      %397 = vmatpush2.bf16.msra.mxu0 0
      %398 = vmatprep.subr.bf16.mxu0 0
      %399 = vmatpush2.bf16.msra.mxu0 0
      %400 = vmatprep.subr.bf16.mxu0 0
      %401 = vmatpush2.bf16.msra.mxu0 0
      %402 = vmatprep.mubr.bf16.mxu0 0
      %403 = vmatmul.mubr.bf16.gmra.mxu0 %v365
      %v404 = vpop.f32.mrf.mxu0
      %v405 = vadd.f32 0.0, %v404
      %v406 = vpop.f32.mrf.mxu0
      %v407 = vpop.f32.mrf.mxu0
      %v408 = vpop.f32.mrf.mxu0
      %409 = vdwg.mxu0
      %v410 = vrcp.pop %v309
      %v411 = vrcp.pop %v312
      %v412 = vmul.f32 %v359, %v410
      %v413 = vmul.f32 %v405, %v411
      %v414 = vpack.c.bf16 %v412, %v412
      %v415 = vpack.c.bf16 %v413, %v413
      %416 = vst [vmem:[%s200] sm:$0xf] %v414
      %417 = vst [vmem:[%s200 + $0x4] sm:$0xf] %v415
      %v418 = vmul.f32 %v412, %v412
      %v419 = vmul.f32 %v413, %v413
      %v420 = vadd.f32 %v418, %v419
      %421 = vadd.xlane.f32.xlu0 %v420
      %v422 = vpop.xlane.xlu0 %421
      %v423 = vrot.slane %v422, 4
      %v424 = vadd.f32 %v422, %v423
      %v425 = vrot.slane %v424, 2
      %v426 = vadd.f32 %v424, %v425
      %v427 = vrot.slane %v426, 1
      %v428 = vadd.f32 %v426, %v427
      %s429 = vtos %v428
      %v430 = vstv %s429
      %vm431 = vcmask 0
      %432 = vst.msk [vmem:[%s204] sm:$0x1] %vm431, %v430
      %s433 = smul.u32 2, %s15
      %p434 = scmp.lt.s32.totalorder %s433, 3
      %s435 = scalar_select %p434, %s433, 3
      %s436 = smul.addr %s435, 4
      %s437 = scalar_lea.vmem %s2, %s436
      %p438 = scmp.lt.s32.totalorder %s15, 1
      %s439 = scalar_select %p438, %s15, 1
      %s440 = scalar_lea.vmem %s3, %s439
      // Predicated region
      $region29: #{attention_forward.1} parent=27 // pred_check
        %p441 = pneg %p85
      $region30: #{attention_forward.1} parent=27 // pred_check_branch
        %443 = sbr.rel (%p441) target = $region32
      $region31: #{attention_forward.1} parent=27 // pred_region
        %s444 = smul.u32 2, %s15
      $region32: #{attention_forward.1} parent=27 // pred_fallthru
        _
      // Predicated region
      $region33: #{attention_forward.1} parent=27 // pred_check
        %p445 = pneg %p111
      $region34: #{attention_forward.1} parent=27 // pred_check_branch
        %447 = sbr.rel (%p445) target = $region36
      $region35: #{attention_forward.1} parent=27 // pred_region
        _
      $region36: #{attention_forward.1} parent=27 // pred_fallthru
        _
    $region28: #{attention_forward.1} parent=5 // pred_fallthru
      _
    %p448 = scmp.le.s32.totalorder 2, %s10
    // Predicated region
    $region37: #{attention_forward.1} parent=5 // pred_check
      %p449 = pneg %p448
    $region38: #{attention_forward.1} parent=5 // pred_check_branch
      %451 = sbr.rel (%p449) target = $region40
    $region39: #{attention_forward.1} parent=5 // pred_region
      %s452 = ssub.s32 %s10, 2
      // Predicated region
      $region41: #{attention_forward.1} parent=39 // pred_check
        %p453 = pneg %p91
      $region42: #{attention_forward.1} parent=39 // pred_check_branch
        %455 = sbr.rel (%p453) target = $region44
      $region43: #{attention_forward.1} parent=39 // pred_region
        %s456 = smul.u32 2, %s16
        %p457 = scmp.lt.s32.totalorder %s456, 3
        %s458 = scalar_select %p457, %s456, 3
        %s459 = smul.addr %s458, 4
        %s460 = scalar_lea.vmem %s2, %s459
      $region44: #{attention_forward.1} parent=39 // pred_fallthru
        _
      // Predicated region
      $region45: #{attention_forward.1} parent=39 // pred_check
        %p461 = pneg %p117
      $region46: #{attention_forward.1} parent=39 // pred_check_branch
        %463 = sbr.rel (%p461) target = $region48
      $region47: #{attention_forward.1} parent=39 // pred_region
        %p464 = scmp.lt.s32.totalorder %s16, 1
        %s465 = scalar_select %p464, %s16, 1
        %s466 = scalar_lea.vmem %s3, %s465
      $region48: #{attention_forward.1} parent=39 // pred_fallthru
        _
    $region40: #{attention_forward.1} parent=5 // pred_fallthru
      _
  $region6: #{attention_forward.1} parent=0 // loop_footer
    %s14 = sadd.s32 1, %s10
  $region7: #{attention_forward.1} parent=0 // loop_footer_branch
    %9 = sbr.rel target = $region3
  $region8: #{attention_forward.1} parent=0 // loop_exit
    _

</llo_original>
